<compile_context>
chip_gen: v7x
topology: tpu7x:2x2x1
jax: 0.10.0
libtpu: 0.0.40
codegen_flags: <defaults>
</compile_context>

<pallas_src>
import functools

import jax
import jax.numpy as jnp
from jax.experimental import pallas as pl
from jax.experimental.pallas import tpu as pltpu


def _round_up(v, m):
    return -(-v // m) * m


def _vmem_budgets():
    """(row-block VMEM budget, scoped vmem limit) per TPU generation."""
    try:
        cap = int(pltpu.get_tpu_info().vmem_capacity_bytes)
    except Exception:
        cap = 0
    if cap >= 96 * 1024 * 1024:
        # v5e / v6e class parts (128 MiB physical VMEM): bigger tiles,
        # fewer grid steps, longer (more efficient) output DMAs.
        return 40 * 1024 * 1024, 64 * 1024 * 1024
    # v7x (64 MiB physical) or unknown backend: stay conservative.
    return 12 * 1024 * 1024, 32 * 1024 * 1024


def _pick_w_tile(w, sw):
    """Contraction tile for the block-diagonal expansion.  rw[j,k]=(k//sw==j)
    is translation-invariant per tile, so one (wt, wt*sw) block serves every
    W tile; smaller wt means fewer MXU flops and a smaller resident matrix."""
    if w <= 512:
        return w
    best = max((d for d in range(64, 513) if w % d == 0), default=None)
    # Non-smooth widths fall back to the full expansion matrix.
    return best if best is not None else w


def _pick_row_tile(rows, w, sh, sw, dtype, budget_bytes, rw_vmem_bytes,
                   min_steps=4):
    """Largest row tile whose double-buffered VMEM footprint (including the
    resident expansion block) fits the budget, sublane-aligned for the dtype,
    and capped so the grid has >= min_steps steps (v7x megacore + pipeline
    overlap; never emit a 1-step grid unless the problem is truly tiny)."""
    dbytes = jnp.dtype(dtype).itemsize
    subl = max(8, 32 // dbytes)              # 8 f32 / 16 bf16,f16 / 32 int8
    if rows <= subl:
        return rows                          # block dim == full dim is legal
    in_row = _round_up(w, 128) * dbytes
    out_row = _round_up(sh * w * sw, 128) * dbytes
    per_row = 2 * (in_row + out_row)         # 2x: double-buffered in & out
    cap_mem = max(subl, (budget_bytes - rw_vmem_bytes) // per_row)
    cap_par = max(subl, _round_up(pl.cdiv(rows, min_steps), subl))
    r_tile = min(cap_mem, cap_par, rows)
    return max(subl, (r_tile // subl) * subl)


def _upsample_rows_kernel(x_ref, rw_ref, o_ref, *, sh, sw, w_tile, n_w_tiles):
    """x_ref:  (r_tile, W)            input rows (N*C*H collapsed).
       rw_ref: (w_tile, w_tile*sw)    one-hot lane-expansion block (bf16),
                                      identical for every W tile.
       o_ref:  (r_tile, sh*W*sw)      output rows in final NCHW memory order."""
    if jnp.dtype(x_ref.dtype).itemsize >= 4:
        # f32 path: 6-pass (HIGHEST) MXU matmul.  HIGH (3-pass) would drop the
        # lowest bf16 split of x (rw's low splits are zero, x's are not), so it
        # is not value-exact; HIGHEST is, and the MXU cost is already bounded
        # by the block-diagonal W tiling (contraction depth = w_tile).
        rw = rw_ref[...].astype(jnp.float32)
        prec = jax.lax.Precision.HIGHEST
    else:
        # bf16 / f16 path: single-pass MXU matmul with f32 accumulation; every
        # product is x*1.0 or x*0.0, so the selection is exact.
        rw = rw_ref[...].astype(x_ref.dtype)
        prec = jax.lax.Precision.DEFAULT

    w_exp = w_tile * sw
    w_out = n_w_tiles * w_exp            # = W * sw
    for t in range(n_w_tiles):
        xt = x_ref[:, t * w_tile:(t + 1) * w_tile]
        # Lane interleave: xw[:, j*sw + b] = xt[:, j] (0/1 selection matmul).
        xw = jnp.dot(xt, rw, precision=prec,
                     preferred_element_type=jnp.float32).astype(o_ref.dtype)
        # H repeat: each input row feeds sh adjacent output rows; with the
        # flat 2D output these are sh lane-contiguous slices of one row.
        for a in range(sh):
            off = a * w_out + t * w_exp
            o_ref[:, off:off + w_exp] = xw


@functools.partial(jax.jit, static_argnums=(1, 2))
def upsample_nearest(x, sh, sw):
    """F.interpolate(x, mode='nearest') for NCHW with integer scales (sh, sw)."""
    n, c, h, w = x.shape
    sh, sw = int(sh), int(sw)
    if sh == 1 and sw == 1:
        return x
    if not jnp.issubdtype(x.dtype, jnp.floating):
        # TODO(synk): integer dtypes bypass the MXU selection matmul (v7x has
        # no integer MXU and f32 rounds above 2^24); plain XLA repeat instead.
        return jnp.repeat(jnp.repeat(x, sh, axis=2), sw, axis=3)

    rows = n * c * h
    row_out = sh * w * sw                    # flattened output row length
    x2 = x.reshape(rows, w)                  # free: metadata-only reshape

    w_tile = _pick_w_tile(w, sw)
    n_w_tiles = w // w_tile

    # One-hot expansion block rw[j, k] = (k // sw == j), shipped as bf16
    # (exact 0/1), block-resident via a constant index_map.
    jj = jnp.arange(w_tile, dtype=jnp.int32)[:, None]
    kk = jnp.arange(w_tile * sw, dtype=jnp.int32)[None, :]
    rw = (kk // sw == jj).astype(jnp.bfloat16)

    dbytes = jnp.dtype(x.dtype).itemsize
    # Resident expansion block footprint (bf16, (16,128) tiles, 2 buffers).
    rw_vmem = 2 * _round_up(w_tile, 16) * _round_up(w_tile * sw, 128) * 2
    budget, vmem_limit = _vmem_budgets()
    r_tile = _pick_row_tile(rows, w, sh, sw, x.dtype, budget, rw_vmem)
    grid = (pl.cdiv(rows, r_tile),)

    cost = pl.CostEstimate(
        flops=2 * rows * w * w_tile * sw,
        transcendentals=0,
        bytes_accessed=rows * w * dbytes * (1 + sh * sw) + w_tile * w_tile * sw * 2,
    )

    out = pl.pallas_call(
        functools.partial(_upsample_rows_kernel,
                          sh=sh, sw=sw, w_tile=w_tile, n_w_tiles=n_w_tiles),
        out_shape=jax.ShapeDtypeStruct((rows, row_out), x.dtype),
        grid=grid,
        in_specs=[
            pl.BlockSpec((r_tile, w), lambda i: (i, 0)),
            pl.BlockSpec((w_tile, w_tile * sw), lambda i: (0, 0)),  # resident
        ],
        # Lane-dense 2D output block, written in final memory order: reshapes
        # to (N, C, H*sh, W*sw) with zero data movement.
        out_specs=pl.BlockSpec((r_tile, row_out), lambda i: (i, 0)),
        compiler_params=pltpu.CompilerParams(
            dimension_semantics=("parallel",),
            vmem_limit_bytes=vmem_limit,
        ),
        cost_estimate=cost,
    )(x2, rw)

    return out.reshape(n, c, h * sh, w * sw)  # free: metadata-only reshape


class UpSample:
    """JAX/Pallas port of the PyTorch UpSample module (mode='nearest',
    integer scale factors or integer-multiple target size)."""

    def __init__(self, size=None, scale_factor=None, mode='nearest',
                 align_corner=None):
        if mode != 'nearest':
            # TODO(synk): 'bilinear'/'bicubic' (and align_corners) have no
            # Pallas implementation here; only exact-integer 'nearest'.
            raise NotImplementedError("only mode='nearest' is implemented")
        self.size = size
        self.scale_factor = scale_factor
        self.mode = mode
        self.align_corner = align_corner

    def __call__(self, x):
        n, c, h, w = x.shape
        if self.scale_factor is not None:
            sf = self.scale_factor
            if not isinstance(sf, (tuple, list)):
                sf = (sf, sf)
            if any(float(v) != int(v) for v in sf):
                # TODO(synk): non-integer scale factors need a gather kernel.
                raise NotImplementedError("only integer scale_factor supported")
            sh, sw = int(sf[0]), int(sf[1])
        else:
            size = self.size
            if isinstance(size, int):
                oh = ow = size
            else:
                oh, ow = int(size[0]), int(size[1])
            if oh % h != 0 or ow % w != 0:
                raise ValueError(
                    "size must be an integer multiple of the input spatial "
                    f"dims; got size={size} for input spatial dims {(h, w)}")
            sh, sw = oh // h, ow // w
        return upsample_nearest(x, sh, sw)


if __name__ == "__main__":
    key = jax.random.PRNGKey(0)
    x = jax.random.normal(key, (2, 4, 16, 16), dtype=jnp.float32)

    # f32, isotropic scale_factor=2.
    mod = UpSample(scale_factor=2, mode='nearest')
    y = jax.block_until_ready(mod(x))
    assert y.shape == (2, 4, 32, 32), y.shape
    ref = jnp.repeat(jnp.repeat(x, 2, axis=2), 2, axis=3)
    assert jnp.allclose(y, ref), "f32 mismatch vs nearest-neighbor reference"

    # bf16 path (single-pass MXU selection, bit-exact).
    xb = x.astype(jnp.bfloat16)
    yb = jax.block_until_ready(UpSample(scale_factor=2)(xb))
    refb = jnp.repeat(jnp.repeat(xb, 2, axis=2), 2, axis=3)
    assert jnp.array_equal(yb, refb), "bf16 path mismatch"

    # size= path, anisotropic integer multiples (2x in H, 3x in W).
    mod2 = UpSample(size=(32, 48), mode='nearest')
    y2 = jax.block_until_ready(mod2(x))
    ref2 = jnp.repeat(jnp.repeat(x, 2, axis=2), 3, axis=3)
    assert y2.shape == (2, 4, 32, 48), y2.shape
    assert jnp.allclose(y2, ref2), "size= path mismatch"

    print("KERNEL_OK")
</pallas_src>

<mosaic_0001>
module attributes {stable_mosaic.version = 11 : i64} {
  func.func @_upsample_rows_kernel(%arg0: i32, %arg1: memref<32x16xf32, #tpu.memory_space<vmem>>, %arg2: memref<16x32xbf16, #tpu.memory_space<vmem>>, %arg3: memref<32x64xf32, #tpu.memory_space<vmem>>) attributes {dimension_semantics = [#tpu.dimension_semantics<parallel>], iteration_bounds = array<i64: 4>, scalar_prefetch = 0 : i64, scratch_operands = 0 : i64, tpu.core_type = #tpu.core_type<tc>, window_params = [{transform_indices = @transform_0, window_bounds = array<i64: 32, 16>}, {pipeline_mode = #tpu.pipeline_mode<synchronous>, transform_indices = @transform_1, window_bounds = array<i64: 16, 32>}, {transform_indices = @transform_2, window_bounds = array<i64: 32, 64>}]} {
    %c0 = arith.constant 0 : index
    %c0_0 = arith.constant 0 : index
    %0 = vector.load %arg2[%c0, %c0_0] : memref<16x32xbf16, #tpu.memory_space<vmem>>, vector<16x32xbf16>
    %1 = arith.extf %0 : vector<16x32xbf16> to vector<16x32xf32>
    %c0_1 = arith.constant 0 : index
    %c0_2 = arith.constant 0 : index
    %2 = vector.load %arg1[%c0_1, %c0_2] : memref<32x16xf32, #tpu.memory_space<vmem>>, vector<32x16xf32>
    %cst = arith.constant dense<0.000000e+00> : vector<32x32xf32>
    %3 = tpu.matmul %2, %1, %cst {dimension_numbers = #tpu.dot_dimension_numbers<[1], [0], [0], [1], [0, 0, 1, 1], [], []>, precision = #tpu.contract_precision<fp32>} : vector<32x16xf32>, vector<16x32xf32>, vector<32x32xf32> -> vector<32x32xf32>
    %c0_3 = arith.constant 0 : index
    %c0_4 = arith.constant 0 : index
    %4 = vector.load %arg3[%c0_3, %c0_4] : memref<32x64xf32, #tpu.memory_space<vmem>>, vector<32x32xf32>
    tpu.vector_store %arg3[%c0_3, %c0_4], %3 {strides = array<i32>} : memref<32x64xf32, #tpu.memory_space<vmem>>, vector<32x32xf32>,
    %c0_5 = arith.constant 0 : index
    %c32 = arith.constant 32 : index
    %5 = vector.load %arg3[%c0_5, %c32] : memref<32x64xf32, #tpu.memory_space<vmem>>, vector<32x32xf32>
    tpu.vector_store %arg3[%c0_5, %c32], %3 {strides = array<i32>} : memref<32x64xf32, #tpu.memory_space<vmem>>, vector<32x32xf32>,
    return
  }
  func.func @transform_0(%arg0: i32) -> (i32, i32) {
    %c0_i32 = arith.constant 0 : i32
    %c0_i32_0 = arith.constant 0 : i32
    return %arg0, %c0_i32 : i32, i32
  }
  func.func @transform_1(%arg0: i32) -> (i32, i32) {
    %c0_i32 = arith.constant 0 : i32
    %c0_i32_0 = arith.constant 0 : i32
    %c0_i32_1 = arith.constant 0 : i32
    return %c0_i32, %c0_i32_0 : i32, i32
  }
  func.func @transform_2(%arg0: i32) -> (i32, i32) {
    %c0_i32 = arith.constant 0 : i32
    %c0_i32_0 = arith.constant 0 : i32
    return %arg0, %c0_i32 : i32, i32
  }
}

</mosaic_0001>

<llo_original>
// kernel: upsample_nearest.1
$region0: #{upsample_nearest.1}
  #allocation0 [shape = 'u32[]', space=smem, size = 0x4, offset = 0x4, fixed_abs, tag = 'smem constant byte address 0x4 - core index']
  #allocation1 [shape = 'u32[144,128]{1,0:T(1,128)}', space=vmem, size = 0x12000, scoped, tag = 'internal scratch']
  %s0 = inlined_call_operand.hbm [shape: f32[128,16], index: 0, kind: input, shape index: {}]
  %s1 = inlined_call_operand.vmem [shape: bf16[16,32], index: 1, kind: input, shape index: {}]
  %s2 = inlined_call_operand.vmem [shape: f32[128,64], index: 2, kind: output, shape index: {}]
  %s3 = sld [smem:[#allocation0]]
  $region45: #{upsample_nearest.1} parent=0
    _
  %s5 = ssub.s32 1, %s3
  %s6 = scalar_select 0, %s5, %s3
  $region1: #{upsample_nearest.1} parent=0
    #allocation2 [shape = 'u8[32768]{0}', space=vmem, size = 0x8000, scoped, tag = 'input window, operand 0']
    #allocation3 [shape = 's32[2]{0}', space=sflag, size = 0x8, scoped, tag = 'scoped memory for upsample_nearest.1']
    %7 = vsyncpa [#allocation3], 0
    %s8 = scalar_lea.sflag [#allocation3], 1
    %9 = vsyncpa %s8, 0
    loop: start=0, step=1, limit=6
    $region2: #{upsample_nearest.1} parent=1 // loop_pre_header
      _
    $region3: #{upsample_nearest.1} parent=1 // loop_header
      %s11 = sphi 0, %s15
      %p12 = scmp.ge.s32.totalorder %s11, 6
      %s21 = sphi 0, %s23
      %s24 = sphi 0, %s21
      %s25 = sphi 0, %s24
      %s41 = sphi 0, %s25
      %s45 = sphi 0, %s45
      %s47 = sphi 0, %s45
      %s48 = sphi 0, %s47
      %s62 = sphi 0, %s48
      %s68 = sphi 0, %s70
      %s71 = sphi 0, %s68
      %s72 = sphi 0, %s71
      %s88 = sphi 0, %s72
    $region4: #{upsample_nearest.1} parent=1 // loop_header_branch
      %14 = sbr.rel (%p12) target = $region8
    $region5: #{upsample_nearest.1} parent=1 // loop_body
      %s16 = ssub.s32 %s11, 1
      %s17 = ssub.s32 %s11, 2
      %s18 = sadd.s32 %s11, 1
      %s19 = ssub.s32 %s11, %s18
      %p20 = scmp.eq.s32.totalorder %s19, 0
      %s22 = sadd.s32 %s21, 1
      %s23 = scalar_select %p20, %s21, %s22
      %p26 = pneg %p20
      %p27 = scmp.eq.s32.totalorder %s11, 3
      %p28 = por %p26, %p27
      %p29 = scmp.ne.s32.totalorder %s21, %s24
      %p30 = scmp.eq.s32.totalorder %s11, 0
      %p31 = por %p29, %p30
      %p32 = scmp.ne.s32.totalorder %s21, %s24
      %p33 = scmp.eq.s32.totalorder %s16, 3
      %p34 = por %p32, %p33
      %p35 = scmp.ne.s32.totalorder %s24, %s25
      %p36 = scmp.eq.s32.totalorder %s16, 0
      %p37 = por %p35, %p36
      %p38 = scmp.ne.s32.totalorder %s24, %s25
      %p39 = scmp.eq.s32.totalorder %s17, 3
      %p40 = por %p38, %p39
      %p42 = scmp.ne.s32.totalorder %s25, %s41
      %p43 = scmp.eq.s32.totalorder %s17, 0
      %p44 = por %p42, %p43
      %s46 = sadd.s32 %s45, 1
      %p49 = scmp.eq.s32.totalorder %s11, 3
      %p50 = scmp.ne.s32.totalorder %s45, %s47
      %p51 = scmp.eq.s32.totalorder %s11, 0
      %p52 = por %p50, %p51
      %p53 = scmp.ne.s32.totalorder %s45, %s47
      %p54 = scmp.eq.s32.totalorder %s16, 3
      %p55 = por %p53, %p54
      %p56 = scmp.ne.s32.totalorder %s47, %s48
      %p57 = scmp.eq.s32.totalorder %s16, 0
      %p58 = por %p56, %p57
      %p59 = scmp.ne.s32.totalorder %s47, %s48
      %p60 = scmp.eq.s32.totalorder %s17, 3
      %p61 = por %p59, %p60
      %p63 = scmp.ne.s32.totalorder %s48, %s62
      %p64 = scmp.eq.s32.totalorder %s17, 0
      %p65 = por %p63, %p64
      %s66 = ssub.s32 %s11, %s18
      %p67 = scmp.eq.s32.totalorder %s66, 0
      %s69 = sadd.s32 %s68, 1
      %s70 = scalar_select %p67, %s68, %s69
      %p73 = pneg %p67
      %p74 = scmp.eq.s32.totalorder %s11, 3
      %p75 = por %p73, %p74
      %p76 = scmp.ne.s32.totalorder %s68, %s71
      %p77 = scmp.eq.s32.totalorder %s11, 0
      %p78 = por %p76, %p77
      %p79 = scmp.ne.s32.totalorder %s68, %s71
      %p80 = scmp.eq.s32.totalorder %s16, 3
      %p81 = por %p79, %p80
      %p82 = scmp.ne.s32.totalorder %s71, %s72
      %p83 = scmp.eq.s32.totalorder %s16, 0
      %p84 = por %p82, %p83
      %p85 = scmp.ne.s32.totalorder %s71, %s72
      %p86 = scmp.eq.s32.totalorder %s17, 3
      %p87 = por %p85, %p86
      %p89 = scmp.ne.s32.totalorder %s72, %s88
      %p90 = scmp.eq.s32.totalorder %s17, 0
      %p91 = por %p89, %p90
      %p92 = scmp.le.s32.totalorder 1, %s11
      %p93 = scmp.lt.s32.totalorder %s11, 5
      %p94 = pnand %p92, %p93
      %p95 = pneg %p94
      // Predicated region
      $region9: #{upsample_nearest.1} parent=5 // pred_check
        _
      $region10: #{upsample_nearest.1} parent=5 // pred_check_branch
        %97 = sbr.rel (%p94) target = $region12
      $region11: #{upsample_nearest.1} parent=5 // pred_region
        %s98 = ssub.s32 %s11, 1
        // Predicated region
        $region13: #{upsample_nearest.1} parent=11 // pred_check
          %p99 = pneg %p58
        $region14: #{upsample_nearest.1} parent=11 // pred_check_branch
          %101 = sbr.rel (%p99) target = $region16
        $region15: #{upsample_nearest.1} parent=11 // pred_region
          _
        $region16: #{upsample_nearest.1} parent=11 // pred_fallthru
          _
      $region12: #{upsample_nearest.1} parent=5 // pred_fallthru
        _
      %p102 = scmp.lt.s32.totalorder %s11, 4
      // Predicated region
      $region17: #{upsample_nearest.1} parent=5 // pred_check
        %p103 = pneg %p102
      $region18: #{upsample_nearest.1} parent=5 // pred_check_branch
        %105 = sbr.rel (%p103) target = $region20
      $region19: #{upsample_nearest.1} parent=5 // pred_region
        // Predicated region
        $region21: #{upsample_nearest.1} parent=19 // pred_check
          %p106 = pneg %p31
        $region22: #{upsample_nearest.1} parent=19 // pred_check_branch
          %108 = sbr.rel (%p106) target = $region24
        $region23: #{upsample_nearest.1} parent=19 // pred_region
          %s109 = sand.u32 %s21, 1
          %s110 = scalar_lea.sflag [#allocation3], %s109
          %s111 = sand.u32 %s21, 1
          %s112 = smul.addr %s111, 32
          %s113 = scalar_lea.vmem [#allocation2], %s112
          %s114 = smul.u32 4, %s11
          %s116 = ssub.s32 512, 512
          %117 = vsyncadd %s110, %s116
          %s118 = smul.addr %s114, 128
          %s119 = scalar_lea.hbm %s0, %s118
          %s120 = sshll.u32 %s113, 4
          %s121 = int_to_ptr.vmem [resolvable:$true] %s120
          %126 = dma.hbm_to_vmem [thread:$0]  %s119, 512, %s121, %s110, 128, 128, 8
        $region24: #{upsample_nearest.1} parent=19 // pred_fallthru
          _
      $region20: #{upsample_nearest.1} parent=5 // pred_fallthru
        _
      %p127 = scmp.le.s32.totalorder 1, %s11
      %p128 = scmp.lt.s32.totalorder %s11, 5
      %p129 = pnand %p127, %p128
      %p130 = pneg %p129
      // Predicated region
      $region25: #{upsample_nearest.1} parent=5 // pred_check
        _
      $region26: #{upsample_nearest.1} parent=5 // pred_check_branch
        %132 = sbr.rel (%p129) target = $region28
      $region27: #{upsample_nearest.1} parent=5 // pred_region
        %s133 = ssub.s32 %s11, 1
        %s134 = sand.u32 %s24, 1
        %s135 = scalar_lea.sflag [#allocation3], %s134
        %s136 = sand.u32 %s24, 1
        %s137 = smul.addr %s136, 32
        %s138 = scalar_lea.vmem [#allocation2], %s137
        // Predicated region
        $region29: #{upsample_nearest.1} parent=27 // pred_check
          %p139 = pneg %p37
        $region30: #{upsample_nearest.1} parent=27 // pred_check_branch
          %141 = sbr.rel (%p139) target = $region32
        $region31: #{upsample_nearest.1} parent=27 // pred_region
          %142 = dma.done %s135, 512
        $region32: #{upsample_nearest.1} parent=27 // pred_fallthru
          _
        %s143 = sand.u32 %s24, 1
        %s144 = scalar_lea.sflag [#allocation3], %s143
        %s145 = sand.u32 %s24, 1
        %s146 = smul.addr %s145, 32
        %s147 = scalar_lea.vmem [#allocation2], %s146
        %p148 = pneg %p37
        %p149 = pneg %p34
        %p150 = pneg %p58
        %p151 = pneg %p55
        %p152 = pneg %p84
        %p153 = pneg %p81
        %s154 = smul.u32 4, %s16
        %p155 = scmp.lt.s32.totalorder %s154, 15
        %s156 = scalar_select %p155, %s154, 15
        %s157 = smul.addr %s156, 8
        %s158 = scalar_lea.vmem %s2, %s157
        %s159 = smul.u32 4, %s16
        %s160 = smul.u32 4, %s16
        %p161 = scmp.lt.s32.totalorder %s160, 15
        %s162 = scalar_select %p161, %s160, 15
        %s163 = smul.addr %s162, 8
        %s164 = scalar_lea.vmem %s2, %s163
        %s165 = smul.u32 4, %s16
        %v166 = vld [vmem:[%s1] sm:$0xf]
        %v167 = vld [vmem:[%s1 + $0x4] sm:$0xf]
        %v168 = vunpack.c.l.bf16 %v166
        %v169 = vunpack.c.l.bf16 %v167
        %v170 = vld [vmem:[%s138] sm:$0xff]
        %v171 = vld [vmem:[%s138 + $0x8] sm:$0xff]
        %v172 = vld [vmem:[%s138 + $0x10] sm:$0xff]
        %v173 = vld [vmem:[%s138 + $0x18] sm:$0xff]
        %vm174 = vcmask 130048
        %v176 = vsel %vm174, %v170, 0
        %v179 = vsel %vm174, %v171, 0
        %v182 = vsel %vm174, %v172, 0
        %v185 = vsel %vm174, %v173, 0
        %187 = vmatprep.subr.mxu0 0.0
        %188 = vmatpush1.msra.mxu0 %v168
        %189 = vmatprep.subr.mxu0 0.0
        %190 = vmatpush1.msra.mxu0 %v169
        %191 = vmatprep.subr.mxu0 0.0
        %192 = vmatpush1.msra.mxu0 0.0
        %193 = vmatprep.subr.mxu0 0.0
        %194 = vmatpush1.msra.mxu0 0.0
        %195 = vmatprep.subr.mxu0 0.0
        %196 = vmatpush1.msra.mxu0 0.0
        %197 = vmatprep.subr.mxu0 0.0
        %198 = vmatpush1.msra.mxu0 0.0
        %199 = vmatprep.subr.mxu0 0.0
        %200 = vmatpush1.msra.mxu0 0.0
        %201 = vmatprep.subr.mxu0 0.0
        %202 = vmatpush1.msra.mxu0 0.0
        %203 = vmatprep.subr.mxu0 0.0
        %204 = vmatpush1.msra.mxu0 0.0
        %205 = vmatprep.subr.mxu0 0.0
        %206 = vmatpush1.msra.mxu0 0.0
        %207 = vmatprep.subr.mxu0 0.0
        %208 = vmatpush1.msra.mxu0 0.0
        %209 = vmatprep.subr.mxu0 0.0
        %210 = vmatpush1.msra.mxu0 0.0
        %211 = vmatprep.subr.mxu0 0.0
        %212 = vmatpush1.msra.mxu0 0.0
        %213 = vmatprep.subr.mxu0 0.0
        %214 = vmatpush1.msra.mxu0 0.0
        %215 = vmatprep.subr.mxu0 0.0
        %216 = vmatpush1.msra.mxu0 0.0
        %217 = vmatprep.subr.mxu0 0.0
        %218 = vmatpush1.msra.mxu0 0.0
        %219 = vmatprep.subr.mxu0 0.0
        %220 = vmatpush1.msra.mxu0 0.0
        %221 = vmatprep.subr.mxu0 0.0
        %222 = vmatpush1.msra.mxu0 0.0
        %223 = vmatprep.subr.mxu0 0.0
        %224 = vmatpush1.msra.mxu0 0.0
        %225 = vmatprep.subr.mxu0 0.0
        %226 = vmatpush1.msra.mxu0 0.0
        %227 = vmatprep.subr.mxu0 0.0
        %228 = vmatpush1.msra.mxu0 0.0
        %229 = vmatprep.subr.mxu0 0.0
        %230 = vmatpush1.msra.mxu0 0.0
        %231 = vmatprep.subr.mxu0 0.0
        %232 = vmatpush1.msra.mxu0 0.0
        %233 = vmatprep.subr.mxu0 0.0
        %234 = vmatpush1.msra.mxu0 0.0
        %235 = vmatprep.subr.mxu0 0.0
        %236 = vmatpush1.msra.mxu0 0.0
        %237 = vmatprep.subr.mxu0 0.0
        %238 = vmatpush1.msra.mxu0 0.0
        %239 = vmatprep.subr.mxu0 0.0
        %240 = vmatpush1.msra.mxu0 0.0
        %241 = vmatprep.subr.mxu0 0.0
        %242 = vmatpush1.msra.mxu0 0.0
        %243 = vmatprep.subr.mxu0 0.0
        %244 = vmatpush1.msra.mxu0 0.0
        %245 = vmatprep.subr.mxu0 0.0
        %246 = vmatpush1.msra.mxu0 0.0
        %247 = vmatprep.subr.mxu0 0.0
        %248 = vmatpush1.msra.mxu0 0.0
        %249 = vmatprep.subr.mxu0 0.0
        %250 = vmatpush1.msra.mxu0 0.0
        %251 = vmatprep.mubr.f32.mxu0 0.0
        %v252 = vand.u32 %v176, 4294901760
        %v253 = vsub.f32 %v176, %v252
        %v254 = vand.u32 %v253, 4294901760
        %v255 = vsub.f32 %v253, %v254
        %v256 = vand.u32 %v255, 4294901760
        %257 = vmatmul.mubr.f32.gmra.mrb[0].mxu0 %v256
        %v258 = vpop.f32.mrb[0].mxu0
        %v259 = vadd.f32 0.0, %v258
        %v260 = vpop.f32.mrb[0].mxu0
        %261 = vmatprep.mubr.f32.mxu0 0.0
        %v262 = vand.u32 %v179, 4294901760
        %v263 = vsub.f32 %v179, %v262
        %v264 = vand.u32 %v263, 4294901760
        %v265 = vsub.f32 %v263, %v264
        %v266 = vand.u32 %v265, 4294901760
        %267 = vmatmul.mubr.f32.gmra.mrb[0].mxu0 %v266
        %v268 = vpop.f32.mrb[0].mxu0
        %v269 = vadd.f32 0.0, %v268
        %v270 = vpop.f32.mrb[0].mxu0
        %271 = vmatprep.mubr.f32.mxu0 0.0
        %v272 = vand.u32 %v182, 4294901760
        %v273 = vsub.f32 %v182, %v272
        %v274 = vand.u32 %v273, 4294901760
        %v275 = vsub.f32 %v273, %v274
        %v276 = vand.u32 %v275, 4294901760
        %277 = vmatmul.mubr.f32.gmra.mrb[0].mxu0 %v276
        %v278 = vpop.f32.mrb[0].mxu0
        %v279 = vadd.f32 0.0, %v278
        %v280 = vpop.f32.mrb[0].mxu0
        %281 = vmatprep.mubr.f32.mxu0 0.0
        %v282 = vand.u32 %v185, 4294901760
        %v283 = vsub.f32 %v185, %v282
        %v284 = vand.u32 %v283, 4294901760
        %v285 = vsub.f32 %v283, %v284
        %v286 = vand.u32 %v285, 4294901760
        %287 = vmatmul.mubr.f32.gmra.mrb[0].mxu0 %v286
        %v288 = vpop.f32.mrb[0].mxu0
        %v289 = vadd.f32 0.0, %v288
        %v290 = vpop.f32.mrb[0].mxu0
        %291 = vdwg.mxu0
        %292 = vmatprep.subr.mxu0 0.0
        %v293 = vsub.f32 %v168, %v168
        %v294 = vand.u32 %v293, 4294901760
        %v295 = vsub.f32 %v293, %v294
        %v296 = vand.u32 %v295, 4294901760
        %297 = vmatpush1.msra.mxu0 %v296
        %298 = vmatprep.subr.mxu0 0.0
        %v299 = vsub.f32 %v169, %v169
        %v300 = vand.u32 %v299, 4294901760
        %v301 = vsub.f32 %v299, %v300
        %v302 = vand.u32 %v301, 4294901760
        %303 = vmatpush1.msra.mxu0 %v302
        %304 = vmatprep.subr.mxu0 0.0
        %305 = vmatpush1.msra.mxu0 0.0
        %306 = vmatprep.subr.mxu0 0.0
        %307 = vmatpush1.msra.mxu0 0.0
        %308 = vmatprep.subr.mxu0 0.0
        %309 = vmatpush1.msra.mxu0 0.0
        %310 = vmatprep.subr.mxu0 0.0
        %311 = vmatpush1.msra.mxu0 0.0
        %312 = vmatprep.subr.mxu0 0.0
        %313 = vmatpush1.msra.mxu0 0.0
        %314 = vmatprep.subr.mxu0 0.0
        %315 = vmatpush1.msra.mxu0 0.0
        %316 = vmatprep.subr.mxu0 0.0
        %317 = vmatpush1.msra.mxu0 0.0
        %318 = vmatprep.subr.mxu0 0.0
        %319 = vmatpush1.msra.mxu0 0.0
        %320 = vmatprep.subr.mxu0 0.0
        %321 = vmatpush1.msra.mxu0 0.0
        %322 = vmatprep.subr.mxu0 0.0
        %323 = vmatpush1.msra.mxu0 0.0
        %324 = vmatprep.subr.mxu0 0.0
        %325 = vmatpush1.msra.mxu0 0.0
        %326 = vmatprep.subr.mxu0 0.0
        %327 = vmatpush1.msra.mxu0 0.0
        %328 = vmatprep.subr.mxu0 0.0
        %329 = vmatpush1.msra.mxu0 0.0
        %330 = vmatprep.subr.mxu0 0.0
        %331 = vmatpush1.msra.mxu0 0.0
        %332 = vmatprep.subr.mxu0 0.0
        %333 = vmatpush1.msra.mxu0 0.0
        %334 = vmatprep.subr.mxu0 0.0
        %335 = vmatpush1.msra.mxu0 0.0
        %336 = vmatprep.subr.mxu0 0.0
        %337 = vmatpush1.msra.mxu0 0.0
        %338 = vmatprep.subr.mxu0 0.0
        %339 = vmatpush1.msra.mxu0 0.0
        %340 = vmatprep.subr.mxu0 0.0
        %341 = vmatpush1.msra.mxu0 0.0
        %342 = vmatprep.subr.mxu0 0.0
        %343 = vmatpush1.msra.mxu0 0.0
        %344 = vmatprep.subr.mxu0 0.0
        %345 = vmatpush1.msra.mxu0 0.0
        %346 = vmatprep.subr.mxu0 0.0
        %347 = vmatpush1.msra.mxu0 0.0
        %348 = vmatprep.subr.mxu0 0.0
        %349 = vmatpush1.msra.mxu0 0.0
        %350 = vmatprep.subr.mxu0 0.0
        %351 = vmatpush1.msra.mxu0 0.0
        %352 = vmatprep.subr.mxu0 0.0
        %353 = vmatpush1.msra.mxu0 0.0
        %354 = vmatprep.subr.mxu0 0.0
        %355 = vmatpush1.msra.mxu0 0.0
        %356 = vmatprep.subr.mxu0 0.0
        %357 = vmatpush1.msra.mxu0 0.0
        %358 = vmatprep.subr.mxu0 0.0
        %359 = vmatpush1.msra.mxu0 0.0
        %360 = vmatprep.subr.mxu0 0.0
        %361 = vmatpush1.msra.mxu0 0.0
        %362 = vmatprep.subr.mxu0 0.0
        %363 = vmatpush1.msra.mxu0 0.0
        %364 = vmatprep.mubr.f32.mxu0 0.0
        %v365 = vand.u32 %v176, 4294901760
        %366 = vmatmul.mubr.f32.gmra.mrb[0].mxu0 %v365
        %v367 = vpop.f32.mrb[0].mxu0
        %v368 = vadd.f32 %v259, %v367
        %v369 = vpop.f32.mrb[0].mxu0
        %370 = vmatprep.mubr.f32.mxu0 0.0
        %v371 = vand.u32 %v179, 4294901760
        %372 = vmatmul.mubr.f32.gmra.mrb[0].mxu0 %v371
        %v373 = vpop.f32.mrb[0].mxu0
        %v374 = vadd.f32 %v269, %v373
        %v375 = vpop.f32.mrb[0].mxu0
        %376 = vmatprep.mubr.f32.mxu0 0.0
        %v377 = vand.u32 %v182, 4294901760
        %378 = vmatmul.mubr.f32.gmra.mrb[0].mxu0 %v377
        %v379 = vpop.f32.mrb[0].mxu0
        %v380 = vadd.f32 %v279, %v379
        %v381 = vpop.f32.mrb[0].mxu0
        %382 = vmatprep.mubr.f32.mxu0 0.0
        %v383 = vand.u32 %v185, 4294901760
        %384 = vmatmul.mubr.f32.gmra.mrb[0].mxu0 %v383
        %v385 = vpop.f32.mrb[0].mxu0
        %v386 = vadd.f32 %v289, %v385
        %v387 = vpop.f32.mrb[0].mxu0
        %388 = vdwg.mxu0
        %389 = vmatprep.subr.mxu0 0.0
        %v390 = vsub.f32 %v168, %v168
        %391 = vmatpush1.msra.mxu0 %v390
        %392 = vmatprep.subr.mxu0 0.0
        %v393 = vsub.f32 %v169, %v169
        %394 = vmatpush1.msra.mxu0 %v393
        %395 = vmatprep.subr.mxu0 0.0
        %396 = vmatpush1.msra.mxu0 0.0
        %397 = vmatprep.subr.mxu0 0.0
        %398 = vmatpush1.msra.mxu0 0.0
        %399 = vmatprep.subr.mxu0 0.0
        %400 = vmatpush1.msra.mxu0 0.0
        %401 = vmatprep.subr.mxu0 0.0
        %402 = vmatpush1.msra.mxu0 0.0
        %403 = vmatprep.subr.mxu0 0.0
        %404 = vmatpush1.msra.mxu0 0.0
        %405 = vmatprep.subr.mxu0 0.0
        %406 = vmatpush1.msra.mxu0 0.0
        %407 = vmatprep.subr.mxu0 0.0
        %408 = vmatpush1.msra.mxu0 0.0
        %409 = vmatprep.subr.mxu0 0.0
        %410 = vmatpush1.msra.mxu0 0.0
        %411 = vmatprep.subr.mxu0 0.0
        %412 = vmatpush1.msra.mxu0 0.0
        %413 = vmatprep.subr.mxu0 0.0
        %414 = vmatpush1.msra.mxu0 0.0
        %415 = vmatprep.subr.mxu0 0.0
        %416 = vmatpush1.msra.mxu0 0.0
        %417 = vmatprep.subr.mxu0 0.0
        %418 = vmatpush1.msra.mxu0 0.0
        %419 = vmatprep.subr.mxu0 0.0
        %420 = vmatpush1.msra.mxu0 0.0
        %421 = vmatprep.subr.mxu0 0.0
        %422 = vmatpush1.msra.mxu0 0.0
        %423 = vmatprep.subr.mxu0 0.0
        %424 = vmatpush1.msra.mxu0 0.0
        %425 = vmatprep.subr.mxu0 0.0
        %426 = vmatpush1.msra.mxu0 0.0
        %427 = vmatprep.subr.mxu0 0.0
        %428 = vmatpush1.msra.mxu0 0.0
        %429 = vmatprep.subr.mxu0 0.0
        %430 = vmatpush1.msra.mxu0 0.0
        %431 = vmatprep.subr.mxu0 0.0
        %432 = vmatpush1.msra.mxu0 0.0
        %433 = vmatprep.subr.mxu0 0.0
        %434 = vmatpush1.msra.mxu0 0.0
        %435 = vmatprep.subr.mxu0 0.0
        %436 = vmatpush1.msra.mxu0 0.0
        %437 = vmatprep.subr.mxu0 0.0
        %438 = vmatpush1.msra.mxu0 0.0
        %439 = vmatprep.subr.mxu0 0.0
        %440 = vmatpush1.msra.mxu0 0.0
        %441 = vmatprep.subr.mxu0 0.0
        %442 = vmatpush1.msra.mxu0 0.0
        %443 = vmatprep.subr.mxu0 0.0
        %444 = vmatpush1.msra.mxu0 0.0
        %445 = vmatprep.subr.mxu0 0.0
        %446 = vmatpush1.msra.mxu0 0.0
        %447 = vmatprep.subr.mxu0 0.0
        %448 = vmatpush1.msra.mxu0 0.0
        %449 = vmatprep.subr.mxu0 0.0
        %450 = vmatpush1.msra.mxu0 0.0
        %451 = vmatprep.subr.mxu0 0.0
        %452 = vmatpush1.msra.mxu0 0.0
        %453 = vmatprep.subr.mxu0 0.0
        %454 = vmatpush1.msra.mxu0 0.0
        %455 = vmatprep.mubr.f32.mxu0 0.0
        %v456 = vand.u32 %v176, 4294901760
        %v457 = vsub.f32 %v176, %v456
        %458 = vmatmul.mubr.f32.gmra.mrb[0].mxu0 %v457
        %v459 = vpop.f32.mrb[0].mxu0
        %v460 = vadd.f32 %v368, %v459
        %v461 = vpop.f32.mrb[0].mxu0
        %462 = vmatprep.mubr.f32.mxu0 0.0
        %v463 = vand.u32 %v179, 4294901760
        %v464 = vsub.f32 %v179, %v463
        %465 = vmatmul.mubr.f32.gmra.mrb[0].mxu0 %v464
        %v466 = vpop.f32.mrb[0].mxu0
        %v467 = vadd.f32 %v374, %v466
        %v468 = vpop.f32.mrb[0].mxu0
        %469 = vmatprep.mubr.f32.mxu0 0.0
        %v470 = vand.u32 %v182, 4294901760
        %v471 = vsub.f32 %v182, %v470
        %472 = vmatmul.mubr.f32.gmra.mrb[0].mxu0 %v471
        %v473 = vpop.f32.mrb[0].mxu0
        %v474 = vadd.f32 %v380, %v473
        %v475 = vpop.f32.mrb[0].mxu0
        %476 = vmatprep.mubr.f32.mxu0 0.0
        %v477 = vand.u32 %v185, 4294901760
        %v478 = vsub.f32 %v185, %v477
        %479 = vmatmul.mubr.f32.gmra.mrb[0].mxu0 %v478
        %v480 = vpop.f32.mrb[0].mxu0
        %v481 = vadd.f32 %v386, %v480
        %v482 = vpop.f32.mrb[0].mxu0
        %483 = vdwg.mxu0
        %484 = vmatprep.subr.mxu0 0.0
        %485 = vmatpush1.msra.mxu0 %v168
        %486 = vmatprep.subr.mxu0 0.0
        %487 = vmatpush1.msra.mxu0 %v169
        %488 = vmatprep.subr.mxu0 0.0
        %489 = vmatpush1.msra.mxu0 0.0
        %490 = vmatprep.subr.mxu0 0.0
        %491 = vmatpush1.msra.mxu0 0.0
        %492 = vmatprep.subr.mxu0 0.0
        %493 = vmatpush1.msra.mxu0 0.0
        %494 = vmatprep.subr.mxu0 0.0
        %495 = vmatpush1.msra.mxu0 0.0
        %496 = vmatprep.subr.mxu0 0.0
        %497 = vmatpush1.msra.mxu0 0.0
        %498 = vmatprep.subr.mxu0 0.0
        %499 = vmatpush1.msra.mxu0 0.0
        %500 = vmatprep.subr.mxu0 0.0
        %501 = vmatpush1.msra.mxu0 0.0
        %502 = vmatprep.subr.mxu0 0.0
        %503 = vmatpush1.msra.mxu0 0.0
        %504 = vmatprep.subr.mxu0 0.0
        %505 = vmatpush1.msra.mxu0 0.0
        %506 = vmatprep.subr.mxu0 0.0
        %507 = vmatpush1.msra.mxu0 0.0
        %508 = vmatprep.subr.mxu0 0.0
        %509 = vmatpush1.msra.mxu0 0.0
        %510 = vmatprep.subr.mxu0 0.0
        %511 = vmatpush1.msra.mxu0 0.0
        %512 = vmatprep.subr.mxu0 0.0
        %513 = vmatpush1.msra.mxu0 0.0
        %514 = vmatprep.subr.mxu0 0.0
        %515 = vmatpush1.msra.mxu0 0.0
        %516 = vmatprep.subr.mxu0 0.0
        %517 = vmatpush1.msra.mxu0 0.0
        %518 = vmatprep.subr.mxu0 0.0
        %519 = vmatpush1.msra.mxu0 0.0
        %520 = vmatprep.subr.mxu0 0.0
        %521 = vmatpush1.msra.mxu0 0.0
        %522 = vmatprep.subr.mxu0 0.0
        %523 = vmatpush1.msra.mxu0 0.0
        %524 = vmatprep.subr.mxu0 0.0
        %525 = vmatpush1.msra.mxu0 0.0
        %526 = vmatprep.subr.mxu0 0.0
        %527 = vmatpush1.msra.mxu0 0.0
        %528 = vmatprep.subr.mxu0 0.0
        %529 = vmatpush1.msra.mxu0 0.0
        %530 = vmatprep.subr.mxu0 0.0
        %531 = vmatpush1.msra.mxu0 0.0
        %532 = vmatprep.subr.mxu0 0.0
        %533 = vmatpush1.msra.mxu0 0.0
        %534 = vmatprep.subr.mxu0 0.0
        %535 = vmatpush1.msra.mxu0 0.0
        %536 = vmatprep.subr.mxu0 0.0
        %537 = vmatpush1.msra.mxu0 0.0
        %538 = vmatprep.subr.mxu0 0.0
        %539 = vmatpush1.msra.mxu0 0.0
        %540 = vmatprep.subr.mxu0 0.0
        %541 = vmatpush1.msra.mxu0 0.0
        %542 = vmatprep.subr.mxu0 0.0
        %543 = vmatpush1.msra.mxu0 0.0
        %544 = vmatprep.subr.mxu0 0.0
        %545 = vmatpush1.msra.mxu0 0.0
        %546 = vmatprep.subr.mxu0 0.0
        %547 = vmatpush1.msra.mxu0 0.0
        %548 = vmatprep.mubr.f32.mxu0 0.0
        %v549 = vand.u32 %v176, 4294901760
        %v550 = vsub.f32 %v176, %v549
        %v551 = vand.u32 %v550, 4294901760
        %552 = vmatmul.mubr.f32.gmra.mrb[0].mxu0 %v551
        %v553 = vpop.f32.mrb[0].mxu0
        %v554 = vadd.f32 %v460, %v553
        %v555 = vpop.f32.mrb[0].mxu0
        %556 = vmatprep.mubr.f32.mxu0 0.0
        %v557 = vand.u32 %v179, 4294901760
        %v558 = vsub.f32 %v179, %v557
        %v559 = vand.u32 %v558, 4294901760
        %560 = vmatmul.mubr.f32.gmra.mrb[0].mxu0 %v559
        %v561 = vpop.f32.mrb[0].mxu0
        %v562 = vadd.f32 %v467, %v561
        %v563 = vpop.f32.mrb[0].mxu0
        %564 = vmatprep.mubr.f32.mxu0 0.0
        %v565 = vand.u32 %v182, 4294901760
        %v566 = vsub.f32 %v182, %v565
        %v567 = vand.u32 %v566, 4294901760
        %568 = vmatmul.mubr.f32.gmra.mrb[0].mxu0 %v567
        %v569 = vpop.f32.mrb[0].mxu0
        %v570 = vadd.f32 %v474, %v569
        %v571 = vpop.f32.mrb[0].mxu0
        %572 = vmatprep.mubr.f32.mxu0 0.0
        %v573 = vand.u32 %v185, 4294901760
        %v574 = vsub.f32 %v185, %v573
        %v575 = vand.u32 %v574, 4294901760
        %576 = vmatmul.mubr.f32.gmra.mrb[0].mxu0 %v575
        %v577 = vpop.f32.mrb[0].mxu0
        %v578 = vadd.f32 %v481, %v577
        %v579 = vpop.f32.mrb[0].mxu0
        %580 = vdwg.mxu0
        %581 = vmatprep.subr.mxu0 0.0
        %v582 = vsub.f32 %v168, %v168
        %v583 = vand.u32 %v582, 4294901760
        %584 = vmatpush1.msra.mxu0 %v583
        %585 = vmatprep.subr.mxu0 0.0
        %v586 = vsub.f32 %v169, %v169
        %v587 = vand.u32 %v586, 4294901760
        %588 = vmatpush1.msra.mxu0 %v587
        %589 = vmatprep.subr.mxu0 0.0
        %590 = vmatpush1.msra.mxu0 0.0
        %591 = vmatprep.subr.mxu0 0.0
        %592 = vmatpush1.msra.mxu0 0.0
        %593 = vmatprep.subr.mxu0 0.0
        %594 = vmatpush1.msra.mxu0 0.0
        %595 = vmatprep.subr.mxu0 0.0
        %596 = vmatpush1.msra.mxu0 0.0
        %597 = vmatprep.subr.mxu0 0.0
        %598 = vmatpush1.msra.mxu0 0.0
        %599 = vmatprep.subr.mxu0 0.0
        %600 = vmatpush1.msra.mxu0 0.0
        %601 = vmatprep.subr.mxu0 0.0
        %602 = vmatpush1.msra.mxu0 0.0
        %603 = vmatprep.subr.mxu0 0.0
        %604 = vmatpush1.msra.mxu0 0.0
        %605 = vmatprep.subr.mxu0 0.0
        %606 = vmatpush1.msra.mxu0 0.0
        %607 = vmatprep.subr.mxu0 0.0
        %608 = vmatpush1.msra.mxu0 0.0
        %609 = vmatprep.subr.mxu0 0.0
        %610 = vmatpush1.msra.mxu0 0.0
        %611 = vmatprep.subr.mxu0 0.0
        %612 = vmatpush1.msra.mxu0 0.0
        %613 = vmatprep.subr.mxu0 0.0
        %614 = vmatpush1.msra.mxu0 0.0
        %615 = vmatprep.subr.mxu0 0.0
        %616 = vmatpush1.msra.mxu0 0.0
        %617 = vmatprep.subr.mxu0 0.0
        %618 = vmatpush1.msra.mxu0 0.0
        %619 = vmatprep.subr.mxu0 0.0
        %620 = vmatpush1.msra.mxu0 0.0
        %621 = vmatprep.subr.mxu0 0.0
        %622 = vmatpush1.msra.mxu0 0.0
        %623 = vmatprep.subr.mxu0 0.0
        %624 = vmatpush1.msra.mxu0 0.0
        %625 = vmatprep.subr.mxu0 0.0
        %626 = vmatpush1.msra.mxu0 0.0
        %627 = vmatprep.subr.mxu0 0.0
        %628 = vmatpush1.msra.mxu0 0.0
        %629 = vmatprep.subr.mxu0 0.0
        %630 = vmatpush1.msra.mxu0 0.0
        %631 = vmatprep.subr.mxu0 0.0
        %632 = vmatpush1.msra.mxu0 0.0
        %633 = vmatprep.subr.mxu0 0.0
        %634 = vmatpush1.msra.mxu0 0.0
        %635 = vmatprep.subr.mxu0 0.0
        %636 = vmatpush1.msra.mxu0 0.0
        %637 = vmatprep.subr.mxu0 0.0
        %638 = vmatpush1.msra.mxu0 0.0
        %639 = vmatprep.subr.mxu0 0.0
        %640 = vmatpush1.msra.mxu0 0.0
        %641 = vmatprep.subr.mxu0 0.0
        %642 = vmatpush1.msra.mxu0 0.0
        %643 = vmatprep.subr.mxu0 0.0
        %644 = vmatpush1.msra.mxu0 0.0
        %645 = vmatprep.subr.mxu0 0.0
        %646 = vmatpush1.msra.mxu0 0.0
        %647 = vmatprep.subr.mxu0 0.0
        %648 = vmatpush1.msra.mxu0 0.0
        %649 = vmatprep.mubr.f32.mxu0 0.0
        %v650 = vand.u32 %v176, 4294901760
        %651 = vmatmul.mubr.f32.gmra.mrb[0].mxu0 %v650
        %v652 = vpop.f32.mrb[0].mxu0
        %v653 = vadd.f32 %v554, %v652
        %v654 = vpop.f32.mrb[0].mxu0
        %655 = vmatprep.mubr.f32.mxu0 0.0
        %v656 = vand.u32 %v179, 4294901760
        %657 = vmatmul.mubr.f32.gmra.mrb[0].mxu0 %v656
        %v658 = vpop.f32.mrb[0].mxu0
        %v659 = vadd.f32 %v562, %v658
        %v660 = vpop.f32.mrb[0].mxu0
        %661 = vmatprep.mubr.f32.mxu0 0.0
        %v662 = vand.u32 %v182, 4294901760
        %663 = vmatmul.mubr.f32.gmra.mrb[0].mxu0 %v662
        %v664 = vpop.f32.mrb[0].mxu0
        %v665 = vadd.f32 %v570, %v664
        %v666 = vpop.f32.mrb[0].mxu0
        %667 = vmatprep.mubr.f32.mxu0 0.0
        %v668 = vand.u32 %v185, 4294901760
        %669 = vmatmul.mubr.f32.gmra.mrb[0].mxu0 %v668
        %v670 = vpop.f32.mrb[0].mxu0
        %v671 = vadd.f32 %v578, %v670
        %v672 = vpop.f32.mrb[0].mxu0
        %673 = vdwg.mxu0
        %674 = vmatprep.subr.mxu0 0.0
        %675 = vmatpush1.msra.mxu0 %v168
        %676 = vmatprep.subr.mxu0 0.0
        %677 = vmatpush1.msra.mxu0 %v169
        %678 = vmatprep.subr.mxu0 0.0
        %679 = vmatpush1.msra.mxu0 0.0
        %680 = vmatprep.subr.mxu0 0.0
        %681 = vmatpush1.msra.mxu0 0.0
        %682 = vmatprep.subr.mxu0 0.0
        %683 = vmatpush1.msra.mxu0 0.0
        %684 = vmatprep.subr.mxu0 0.0
        %685 = vmatpush1.msra.mxu0 0.0
        %686 = vmatprep.subr.mxu0 0.0
        %687 = vmatpush1.msra.mxu0 0.0
        %688 = vmatprep.subr.mxu0 0.0
        %689 = vmatpush1.msra.mxu0 0.0
        %690 = vmatprep.subr.mxu0 0.0
        %691 = vmatpush1.msra.mxu0 0.0
        %692 = vmatprep.subr.mxu0 0.0
        %693 = vmatpush1.msra.mxu0 0.0
        %694 = vmatprep.subr.mxu0 0.0
        %695 = vmatpush1.msra.mxu0 0.0
        %696 = vmatprep.subr.mxu0 0.0
        %697 = vmatpush1.msra.mxu0 0.0
        %698 = vmatprep.subr.mxu0 0.0
        %699 = vmatpush1.msra.mxu0 0.0
        %700 = vmatprep.subr.mxu0 0.0
        %701 = vmatpush1.msra.mxu0 0.0
        %702 = vmatprep.subr.mxu0 0.0
        %703 = vmatpush1.msra.mxu0 0.0
        %704 = vmatprep.subr.mxu0 0.0
        %705 = vmatpush1.msra.mxu0 0.0
        %706 = vmatprep.subr.mxu0 0.0
        %707 = vmatpush1.msra.mxu0 0.0
        %708 = vmatprep.subr.mxu0 0.0
        %709 = vmatpush1.msra.mxu0 0.0
        %710 = vmatprep.subr.mxu0 0.0
        %711 = vmatpush1.msra.mxu0 0.0
        %712 = vmatprep.subr.mxu0 0.0
        %713 = vmatpush1.msra.mxu0 0.0
        %714 = vmatprep.subr.mxu0 0.0
        %715 = vmatpush1.msra.mxu0 0.0
        %716 = vmatprep.subr.mxu0 0.0
        %717 = vmatpush1.msra.mxu0 0.0
        %718 = vmatprep.subr.mxu0 0.0
        %719 = vmatpush1.msra.mxu0 0.0
        %720 = vmatprep.subr.mxu0 0.0
        %721 = vmatpush1.msra.mxu0 0.0
        %722 = vmatprep.subr.mxu0 0.0
        %723 = vmatpush1.msra.mxu0 0.0
        %724 = vmatprep.subr.mxu0 0.0
        %725 = vmatpush1.msra.mxu0 0.0
        %726 = vmatprep.subr.mxu0 0.0
        %727 = vmatpush1.msra.mxu0 0.0
        %728 = vmatprep.subr.mxu0 0.0
        %729 = vmatpush1.msra.mxu0 0.0
        %730 = vmatprep.subr.mxu0 0.0
        %731 = vmatpush1.msra.mxu0 0.0
        %732 = vmatprep.subr.mxu0 0.0
        %733 = vmatpush1.msra.mxu0 0.0
        %734 = vmatprep.subr.mxu0 0.0
        %735 = vmatpush1.msra.mxu0 0.0
        %736 = vmatprep.subr.mxu0 0.0
        %737 = vmatpush1.msra.mxu0 0.0
        %738 = vmatprep.mubr.f32.mxu0 0.0
        %v739 = vand.u32 %v176, 4294901760
        %740 = vmatmul.mubr.f32.gmra.mrb[0].mxu0 %v739
        %v741 = vpop.f32.mrb[0].mxu0
        %v742 = vadd.f32 %v653, %v741
        %v743 = vpop.f32.mrb[0].mxu0
        %744 = vmatprep.mubr.f32.mxu0 0.0
        %v745 = vand.u32 %v179, 4294901760
        %746 = vmatmul.mubr.f32.gmra.mrb[0].mxu0 %v745
        %v747 = vpop.f32.mrb[0].mxu0
        %v748 = vadd.f32 %v659, %v747
        %v749 = vpop.f32.mrb[0].mxu0
        %750 = vmatprep.mubr.f32.mxu0 0.0
        %v751 = vand.u32 %v182, 4294901760
        %752 = vmatmul.mubr.f32.gmra.mrb[0].mxu0 %v751
        %v753 = vpop.f32.mrb[0].mxu0
        %v754 = vadd.f32 %v665, %v753
        %v755 = vpop.f32.mrb[0].mxu0
        %756 = vmatprep.mubr.f32.mxu0 0.0
        %v757 = vand.u32 %v185, 4294901760
        %758 = vmatmul.mubr.f32.gmra.mrb[0].mxu0 %v757
        %v759 = vpop.f32.mrb[0].mxu0
        %v760 = vadd.f32 %v671, %v759
        %v761 = vpop.f32.mrb[0].mxu0
        %762 = vdwg.mxu0
        %vm763 = vcmask 261120
        %764 = vst.msk [vmem:[%s164] sm:$0xff] %vm763, %v742
        %765 = vst.msk [vmem:[%s164 + $0x8] sm:$0xff] %vm763, %v748
        %766 = vst.msk [vmem:[%s164 + $0x10] sm:$0xff] %vm763, %v754
        %767 = vst.msk [vmem:[%s164 + $0x18] sm:$0xff] %vm763, %v760
        %772 = vrot.lane.b32.xlu0 %v742, 32
        %v773 = vpop.permute.xlu0 %772
        %774 = vrot.lane.b32.xlu0 %v748, 32
        %v775 = vpop.permute.xlu0 %774
        %776 = vrot.lane.b32.xlu0 %v754, 32
        %v777 = vpop.permute.xlu0 %776
        %778 = vrot.lane.b32.xlu0 %v760, 32
        %v779 = vpop.permute.xlu0 %778
        %vm784 = vcmask 523520
        %785 = vst.msk [vmem:[%s164] sm:$0xff] %vm784, %v773
        %786 = vst.msk [vmem:[%s164 + $0x8] sm:$0xff] %vm784, %v775
        %787 = vst.msk [vmem:[%s164 + $0x10] sm:$0xff] %vm784, %v777
        %788 = vst.msk [vmem:[%s164 + $0x18] sm:$0xff] %vm784, %v779
        %s789 = smul.u32 4, %s16
        %p790 = scmp.lt.s32.totalorder %s789, 15
        %s791 = scalar_select %p790, %s789, 15
        %s792 = smul.addr %s791, 8
        %s793 = scalar_lea.vmem %s2, %s792
        // Predicated region
        $region33: #{upsample_nearest.1} parent=27 // pred_check
          %p794 = pneg %p81
        $region34: #{upsample_nearest.1} parent=27 // pred_check_branch
          %796 = sbr.rel (%p794) target = $region36
        $region35: #{upsample_nearest.1} parent=27 // pred_region
          %s797 = smul.u32 4, %s16
        $region36: #{upsample_nearest.1} parent=27 // pred_fallthru
          _
      $region28: #{upsample_nearest.1} parent=5 // pred_fallthru
        _
      %p798 = scmp.le.s32.totalorder 2, %s11
      // Predicated region
      $region37: #{upsample_nearest.1} parent=5 // pred_check
        %p799 = pneg %p798
      $region38: #{upsample_nearest.1} parent=5 // pred_check_branch
        %801 = sbr.rel (%p799) target = $region40
      $region39: #{upsample_nearest.1} parent=5 // pred_region
        %s802 = ssub.s32 %s11, 2
        // Predicated region
        $region41: #{upsample_nearest.1} parent=39 // pred_check
          %p803 = pneg %p87
        $region42: #{upsample_nearest.1} parent=39 // pred_check_branch
          %805 = sbr.rel (%p803) target = $region44
        $region43: #{upsample_nearest.1} parent=39 // pred_region
          %s806 = smul.u32 4, %s17
          %p807 = scmp.lt.s32.totalorder %s806, 15
          %s808 = scalar_select %p807, %s806, 15
          %s809 = smul.addr %s808, 8
          %s810 = scalar_lea.vmem %s2, %s809
        $region44: #{upsample_nearest.1} parent=39 // pred_fallthru
          _
      $region40: #{upsample_nearest.1} parent=5 // pred_fallthru
        _
    $region6: #{upsample_nearest.1} parent=1 // loop_footer
      %s15 = sadd.s32 1, %s11
    $region7: #{upsample_nearest.1} parent=1 // loop_footer_branch
      %10 = sbr.rel target = $region3
    $region8: #{upsample_nearest.1} parent=1 // loop_exit
      _
    %811 = vsyncpa [#allocation3], 1
    %s812 = scalar_lea.sflag [#allocation3], 1
    %813 = vsyncpa %s812, 1

</llo_original>
